<compile_context>
chip_gen: v7x
topology: tpu7x:2x2x1
jax: 0.10.0
libtpu: 0.0.40
codegen_flags: <defaults>
</compile_context>

<pallas_src>
import math

import jax
import jax.numpy as jnp
from jax.experimental import pallas as pl
from jax.experimental.pallas import tpu as pltpu

# 0.5*x*(1 + tanh(c*(x + a*x^3)))  ==  x * sigmoid(2c*(x + a*x^3))
#                                  ==  x * recip(1 + exp(-(2c*x + 2c*a*x^3)))
_C = math.sqrt(2.0 / math.pi)
_NC1 = -2.0 * _C              # pre-negated linear coefficient
_NC3 = _NC1 * 0.044715        # pre-negated cubic coefficient
_MiB = 1024 * 1024


def _gelu_kernel(x_ref, o_ref):
    # Compute in f32 (safe on all generations; kernel stays mem-bound).
    # TODO(synk): optional bf16 polynomial fast path gated to v6e/v7x only.
    xf = x_ref[...].astype(jnp.float32)
    # Horner form, 4 VALU ops to build t_neg.
    t_neg = xf * (jnp.float32(_NC1) + jnp.float32(_NC3) * xf * xf)
    denom = jnp.float32(1.0) + jnp.exp(t_neg)          # exp -> EUP slot
    # reciprocal instead of a true f32 divide (avoids the VALU Newton chain);
    # approx=False keeps the 1e-5 accuracy contract.
    o_ref[...] = (xf * pl.reciprocal(denom, approx=False)).astype(o_ref.dtype)


def _gelu_jnp(x):
    """Plain-jnp GELU, used only for the <128-element tail of odd totals."""
    xf = x.astype(jnp.float32)
    return (xf * jax.nn.sigmoid(xf * (-_NC1 + (-_NC3) * xf * xf))).astype(x.dtype)


def _gelu_2d(x2d):
    """Run the Pallas kernel on a lane-dense (rows, C) slab (C % 128 == 0)."""
    rows, cols = x2d.shape
    itemsize = jnp.dtype(x2d.dtype).itemsize
    sublane = max(8, 32 // itemsize)          # 8 f32, 16 bf16, 32 int8/fp8
    total_bytes = rows * cols * itemsize

    try:
        vmem_bytes = pltpu.get_tpu_info().vmem_capacity_bytes
    except Exception:
        vmem_bytes = 64 * _MiB                # conservative (v7x-sized) fallback

    # Byte budget: VMEM-safe ceiling (double-buffered in+out stays ~VMEM/4),
    # plus a ~total/8 cap so medium tensors get >= 8 pipelined grid steps.
    block_bytes = min(8 * _MiB, vmem_bytes // 16)
    block_bytes = min(block_bytes, max(1 * _MiB, total_bytes // 8))
    block_bytes = max(block_bytes, 256 * 1024)

    block_rows = block_bytes // (cols * itemsize)
    block_rows = max(sublane, (block_rows // sublane) * sublane)

    if block_rows >= rows:
        if rows >= 2 * sublane:
            # Keep at least 2 grid steps: shards across v7x's 2 TCs and gives
            # the DMA pipeline something to overlap.
            half = pl.cdiv(rows, 2)
            block_rows = ((half + sublane - 1) // sublane) * sublane
        else:
            block_rows = rows                 # tiny tensor: one full-extent block

    grid = (pl.cdiv(rows, block_rows),)
    spec = pl.BlockSpec((block_rows, cols), lambda i: (i, 0))

    n_elems = rows * cols
    cost = pl.CostEstimate(
        flops=8 * n_elems,
        transcendentals=n_elems,
        bytes_accessed=2 * total_bytes,
    )

    # Raise the scoped-VMEM limit above v5e's 16 MiB default; stay well under
    # physical capacity on every generation.
    vmem_limit = int(min(vmem_bytes // 2, 100 * _MiB))

    return pl.pallas_call(
        _gelu_kernel,
        out_shape=jax.ShapeDtypeStruct((rows, cols), x2d.dtype),
        grid_spec=pltpu.PrefetchScalarGridSpec(
            num_scalar_prefetch=0,
            grid=grid,
            in_specs=[spec],
            out_specs=spec,
        ),
        compiler_params=pltpu.CompilerParams(
            dimension_semantics=("parallel",),
            vmem_limit_bytes=vmem_limit,
        ),
        cost_estimate=cost,
    )(x2d)


def gelu_pallas(x):
    """Elementwise tanh-GELU. Accepts any shape; hot path is copy-free."""
    total = math.prod(x.shape)
    if total == 0:
        return x

    # Pick the widest lane-dense column count (multiple of 128) dividing the
    # element count -> pure metadata reshape, unmasked full-lane stores.
    cols = 0
    for cand in (4096, 2048, 1024, 512, 256, 128):
        if total % cand == 0:
            cols = cand
            break

    if cols == 0:
        # Odd total: kernel over the 128-aligned prefix, jnp over the tiny
        # (<128-element) tail — never pad/copy the whole array.
        main = (total // 128) * 128
        flat = x.reshape(total)
        if main == 0:
            return _gelu_jnp(x)
        y_main = _gelu_2d(flat[:main].reshape(main // 128, 128)).reshape(main)
        y_tail = _gelu_jnp(flat[main:])
        return jnp.concatenate([y_main, y_tail]).reshape(x.shape)

    return _gelu_2d(x.reshape(total // cols, cols)).reshape(x.shape)


def gelu_reference(x):
    xf = x.astype(jnp.float32)
    return (0.5 * xf * (1.0 + jnp.tanh(jnp.sqrt(2.0 / jnp.pi)
            * (xf + 0.044715 * jnp.power(xf, 3))))).astype(x.dtype)


if __name__ == "__main__":
    key = jax.random.PRNGKey(0)
    batch, seq, hidden = 2, 8, 32
    x = jax.random.normal(key, (batch, seq, hidden), dtype=jnp.float32)

    y = jax.block_until_ready(gelu_pallas(x))
    y_ref = gelu_reference(x)
    assert y.shape == x.shape and y.dtype == x.dtype
    assert jnp.allclose(y, y_ref, atol=1e-5, rtol=1e-5)

    # Large-magnitude inputs: exp saturation must not leak NaN/Inf.
    x_big = x * 12.0
    y_big = jax.block_until_ready(gelu_pallas(x_big))
    assert jnp.all(jnp.isfinite(y_big))
    assert jnp.allclose(y_big, gelu_reference(x_big), atol=1e-4, rtol=1e-4)

    # Non-128-multiple element count exercises the prefix + tail path.
    x_odd = jax.random.normal(jax.random.PRNGKey(1), (3, 43, 5), dtype=jnp.float32)
    y_odd = jax.block_until_ready(gelu_pallas(x_odd))
    assert jnp.allclose(y_odd, gelu_reference(x_odd), atol=1e-5, rtol=1e-5)

    print("KERNEL_OK")
</pallas_src>

<mosaic_0001>
module attributes {stable_mosaic.version = 11 : i64} {
  func.func @_gelu_kernel(%arg0: i32, %arg1: memref<1x512xf32, #tpu.memory_space<vmem>>, %arg2: memref<1x512xf32, #tpu.memory_space<vmem>>) attributes {dimension_semantics = [#tpu.dimension_semantics<parallel>], iteration_bounds = array<i64: 1>, scalar_prefetch = 0 : i64, scratch_operands = 0 : i64, tpu.core_type = #tpu.core_type<tc>, window_params = [{transform_indices = @transform_0, window_bounds = array<i64: 1, 512>}, {transform_indices = @transform_1, window_bounds = array<i64: 1, 512>}]} {
    %c0 = arith.constant 0 : index
    %c0_0 = arith.constant 0 : index
    %0 = vector.load %arg1[%c0, %c0_0] : memref<1x512xf32, #tpu.memory_space<vmem>>, vector<1x512xf32>
    %cst = arith.constant -0.0713548139 : f32
    %1 = vector.broadcast %cst : f32 to vector<1x512xf32>
    %2 = arith.mulf %1, %0 : vector<1x512xf32>
    %3 = arith.mulf %2, %0 : vector<1x512xf32>
    %cst_1 = arith.constant -1.59576917 : f32
    %4 = vector.broadcast %cst_1 : f32 to vector<1x512xf32>
    %5 = arith.addf %4, %3 : vector<1x512xf32>
    %6 = arith.mulf %0, %5 : vector<1x512xf32>
    %7 = math.exp %6 : vector<1x512xf32>
    %cst_2 = arith.constant 1.000000e+00 : f32
    %8 = vector.broadcast %cst_2 : f32 to vector<1x512xf32>
    %9 = arith.addf %8, %7 : vector<1x512xf32>
    %10 = tpu.reciprocal %9 : vector<1x512xf32> -> vector<1x512xf32>
    %11 = arith.mulf %0, %10 : vector<1x512xf32>
    %c0_3 = arith.constant 0 : index
    %c0_4 = arith.constant 0 : index
    %12 = vector.load %arg2[%c0_3, %c0_4] : memref<1x512xf32, #tpu.memory_space<vmem>>, vector<1x512xf32>
    tpu.vector_store %arg2[%c0_3, %c0_4], %11 {strides = array<i32>} : memref<1x512xf32, #tpu.memory_space<vmem>>, vector<1x512xf32>,
    return
  }
  func.func @transform_0(%arg0: i32) -> (i32, i32) {
    %c0_i32 = arith.constant 0 : i32
    %c0_i32_0 = arith.constant 0 : i32
    return %arg0, %c0_i32 : i32, i32
  }
  func.func @transform_1(%arg0: i32) -> (i32, i32) {
    %c0_i32 = arith.constant 0 : i32
    %c0_i32_0 = arith.constant 0 : i32
    return %arg0, %c0_i32 : i32, i32
  }
}

</mosaic_0001>

<llo_original>
// kernel: tpu_custom_call.1
$region0: #{tpu_custom_call.1}
  #allocation0 [shape = 'u32[]', space=smem, size = 0x4, offset = 0x4, fixed_abs, tag = 'smem constant byte address 0x4 - core index']
  #allocation1 [shape = 'u32[144,128]{1,0:T(1,128)}', space=vmem, size = 0x12000, scoped, tag = 'internal scratch']
  %s0 = inlined_call_operand.hbm [shape: f32[1,512], index: 0, kind: input, shape index: {}]
  %s1 = inlined_call_operand.hbm [shape: f32[1,512], index: 1, kind: output, shape index: {}]
  %s2 = sld [smem:[#allocation0]]
  $region18: #{tpu_custom_call.1} parent=0
    _
  %s4 = ssub.s32 1, %s2
  %s5 = scalar_select 0, %s4, %s2
  $region1: #{tpu_custom_call.1} parent=0
    #allocation2 [shape = 'u8[2048]{0}', space=vmem, size = 0x800, scoped, tag = 'input window, operand 0, single buffered']
    #allocation3 [shape = 's32[1]{0}', space=sflag, size = 0x4, scoped, tag = 'scoped memory for tpu_custom_call.1']
    #allocation4 [shape = 's32[1]{0}', space=sflag, size = 0x4, scoped, tag = 'scoped memory for tpu_custom_call.1']
    #allocation5 [shape = 'u8[2048]{0}', space=vmem, size = 0x800, scoped, tag = 'output window, operand 0, single buffered']
    %6 = vsyncpa [#allocation3], 0
    %7 = vsyncpa [#allocation4], 0
    // Predicated region
    $region2: #{tpu_custom_call.1} parent=1 // pred_check
      _
    $region3: #{tpu_custom_call.1} parent=1 // pred_check_branch
      %9 = sbr.rel (0) target = $region5
    $region4: #{tpu_custom_call.1} parent=1 // pred_region
      %s11 = ssub.s32 64, 64
      %12 = vsyncadd [#allocation3], %s11
      %s14 = sshll.u32 [#allocation2], 4
      %s15 = int_to_ptr.vmem [resolvable:$true] %s14
      %17 = dma.hbm_to_vmem [thread:$0]  %s0, 64, %s15, [#allocation3]
    $region5: #{tpu_custom_call.1} parent=1 // pred_fallthru
      _
    // Predicated region
    $region6: #{tpu_custom_call.1} parent=1 // pred_check
      _
    $region7: #{tpu_custom_call.1} parent=1 // pred_check_branch
      %19 = sbr.rel (0) target = $region9
    $region8: #{tpu_custom_call.1} parent=1 // pred_region
      %20 = dma.done [#allocation3], 64
    $region9: #{tpu_custom_call.1} parent=1 // pred_fallthru
      _
    %v21 = vld [vmem:[#allocation2] sm:$0xf]
    %v22 = vmul.f32 %v21, -0.071354814
    %v23 = vmul.f32 %v22, %v21
    %v24 = vadd.f32 %v23, -1.5957692
    %v25 = vmul.f32 %v21, %v24
    %v26 = vmul.f32 %v25, 1.442695
    %v27 = vpow.pop %v26
    %v28 = vadd.f32 %v27, 1.0
    %v29 = vrcp.pop %v28
    %v30 = vmul.f32 %v21, %v29
    %v31 = vlaneseq
    %vm32 = vcmp.ge.s32.totalorder %v31, 0
    %vm33 = vcmp.lt.s32.totalorder %v31, 512
    %vm34 = vmand %vm32, %vm33
    %35 = vst.msk [vmem:[#allocation5] sm:$0xf] %vm34, %v30
    // Predicated region
    $region10: #{tpu_custom_call.1} parent=1 // pred_check
      _
    $region11: #{tpu_custom_call.1} parent=1 // pred_check_branch
      %37 = sbr.rel (0) target = $region13
    $region12: #{tpu_custom_call.1} parent=1 // pred_region
      %s39 = ssub.s32 64, 64
      %40 = vsyncadd [#allocation4], %s39
      %s42 = sshll.u32 [#allocation5], 4
      %s43 = int_to_ptr.vmem [resolvable:$true] %s42
      %45 = dma.vmem_to_hbm [thread:$0]  %s43, 64, %s1, [#allocation4]
    $region13: #{tpu_custom_call.1} parent=1 // pred_fallthru
      _
    // Predicated region
    $region14: #{tpu_custom_call.1} parent=1 // pred_check
      _
    $region15: #{tpu_custom_call.1} parent=1 // pred_check_branch
      %47 = sbr.rel (0) target = $region17
    $region16: #{tpu_custom_call.1} parent=1 // pred_region
      %48 = dma.done [#allocation4], 64
    $region17: #{tpu_custom_call.1} parent=1 // pred_fallthru
      _
    %49 = vsyncpa [#allocation3], 1
    %50 = vsyncpa [#allocation4], 1

</llo_original>
